<compile_context>
chip_gen: v6e
topology: v6e:2x2x1
jax: 0.10.0
libtpu: 0.0.40
codegen_flags: <defaults>
</compile_context>

<pallas_src>
import functools

import jax
import jax.numpy as jnp
from jax.experimental import pallas as pl
from jax.experimental.pallas import tpu as pltpu


def _channel_gate_kernel(x_ref, w1_ref, b1_ref, w2_ref, b2_ref, o_ref, *, hw_true):
    x = x_ref[...].astype(jnp.float32)            # (Bt, C, HWp), upcast in-kernel (free: mem-bound)
    bt, c, hwp = x.shape

    if hwp != hw_true:                            # static branch: only when spatial axis was padded
        lane = jax.lax.broadcasted_iota(jnp.int32, (bt, c, hwp), 2)
        valid = lane < hw_true
        x_sum = jnp.where(valid, x, 0.0)
        x_max = jnp.where(valid, x, jnp.finfo(jnp.float32).min)
    else:
        x_sum = x
        x_max = x

    # Global pools over the spatial (lane) axis, f32 accumulation.
    avg = jnp.sum(x_sum, axis=2) * (1.0 / hw_true)     # (Bt, C)  == F.avg_pool2d over full spatial
    mx = jnp.max(x_max, axis=2)                        # (Bt, C)  == F.max_pool2d over full spatial

    w1 = w1_ref[...]                                   # (C, Ch)
    b1 = b1_ref[...]                                   # (1, Ch)
    w2 = w2_ref[...]                                   # (Ch, C)
    b2 = b2_ref[...]                                   # (1, C)

    # Fused MLP over both pools at once: P = [avg ; max] -> one matmul per layer.
    p = jnp.concatenate([avg, mx], axis=0)                                      # (2*Bt, C)
    h = jnp.maximum(jnp.dot(p, w1, preferred_element_type=jnp.float32) + b1, 0.0)  # (2*Bt, Ch)
    a = jnp.dot(h, w2, preferred_element_type=jnp.float32) + b2                 # (2*Bt, C)
    att = a[:bt] + a[bt:]                              # channel_att_sum (includes 2*b2, as in ref)

    # sigmoid: divide routed to EUP via approx reciprocal.
    gate = pl.reciprocal(1.0 + jnp.exp(-att), approx=True)                      # (Bt, C)

    o_ref[...] = (x * gate[:, :, None]).astype(o_ref.dtype)


def channel_gate(x, w1, b1, w2, b2, *, target_block_bytes=2 * 1024 * 1024):
    """ChannelGate forward.

    x : (B, C, H, W)     (any float dtype; I/O stays in this dtype)
    w1: (C, Ch), b1: (Ch,)   -- first Linear   (y = p @ w1 + b1)
    w2: (Ch, C), b2: (C,)    -- second Linear
    """
    B, C, H, W = x.shape
    HW = H * W
    Ch = w1.shape[1]
    dtype = x.dtype
    itemsize = jnp.dtype(dtype).itemsize

    # Lane-dense spatial axis: pad H*W up to a multiple of 128.
    HWp = pl.cdiv(HW, 128) * 128

    # Batch tile: biggest Bt such that one x block is ~target_block_bytes (plane is tiny at small
    # C/HW, so this packs many planes per grid step and amortizes per-step overhead).
    plane_bytes = C * HWp * itemsize
    Bt = int(max(1, min(B, target_block_bytes // plane_bytes)))
    Bp = pl.cdiv(B, Bt) * Bt

    x_r = x.reshape(B, C, HW)
    if Bp != B or HWp != HW:
        # Zero padding is safe: padded batch planes are discarded, and padded spatial lanes are
        # masked out of the pools inside the kernel (mean divides by the true HW).
        x_r = jnp.pad(x_r, ((0, Bp - B), (0, 0), (0, HWp - HW)))

    w1f = jnp.asarray(w1, jnp.float32)                 # (C, Ch)
    b1f = jnp.asarray(b1, jnp.float32).reshape(1, Ch)
    w2f = jnp.asarray(w2, jnp.float32)                 # (Ch, C)
    b2f = jnp.asarray(b2, jnp.float32).reshape(1, C)

    out = pl.pallas_call(
        functools.partial(_channel_gate_kernel, hw_true=HW),
        out_shape=jax.ShapeDtypeStruct((Bp, C, HWp), dtype),
        grid_spec=pltpu.PrefetchScalarGridSpec(
            num_scalar_prefetch=0,
            grid=(Bp // Bt,),
            in_specs=[
                pl.BlockSpec((Bt, C, HWp), lambda b: (b, 0, 0)),  # x tile: Bt planes per step
                pl.BlockSpec((C, Ch), lambda b: (0, 0)),          # W1 (grid-invariant)
                pl.BlockSpec((1, Ch), lambda b: (0, 0)),          # b1
                pl.BlockSpec((Ch, C), lambda b: (0, 0)),          # W2
                pl.BlockSpec((1, C), lambda b: (0, 0)),           # b2
            ],
            out_specs=pl.BlockSpec((Bt, C, HWp), lambda b: (b, 0, 0)),
        ),
        compiler_params=pltpu.CompilerParams(
            dimension_semantics=("parallel",),
            vmem_limit_bytes=32 * 1024 * 1024,
        ),
    )(x_r, w1f, b1f, w2f, b2f)

    if Bp != B or HWp != HW:
        out = out[:B, :, :HW]
    return out.reshape(B, C, H, W)


def _channel_gate_ref(x, w1, b1, w2, b2):
    B, C, H, W = x.shape
    xf = x.reshape(B, C, H * W).astype(jnp.float32)
    avg = jnp.mean(xf, axis=2)          # (B, C)
    mx = jnp.max(xf, axis=2)            # (B, C)

    def mlp(p):
        return jnp.maximum(p @ w1 + b1, 0.0) @ w2 + b2

    gate = jax.nn.sigmoid(mlp(avg) + mlp(mx))       # (B, C)
    return (x.astype(jnp.float32) * gate[:, :, None, None]).astype(x.dtype)


if __name__ == "__main__":
    key = jax.random.PRNGKey(0)
    k1, k2, k3, k4, k5 = jax.random.split(key, 5)

    batch, channels, H, W = 2, 32, 16, 16
    reduction_ratio = 8
    hidden = channels // reduction_ratio            # 4

    x = jax.random.uniform(k1, (batch, channels, H, W), dtype=jnp.float32)
    w1 = jax.random.normal(k2, (channels, hidden), dtype=jnp.float32) * (channels ** -0.5)
    b1 = jax.random.normal(k3, (hidden,), dtype=jnp.float32) * 0.01
    w2 = jax.random.normal(k4, (hidden, channels), dtype=jnp.float32) * (hidden ** -0.5)
    b2 = jax.random.normal(k5, (channels,), dtype=jnp.float32) * 0.01

    out = channel_gate(x, w1, b1, w2, b2)
    jax.block_until_ready(out)

    ref = _channel_gate_ref(x, w1, b1, w2, b2)
    assert out.shape == x.shape
    assert out.dtype == x.dtype
    assert bool(jnp.all(jnp.isfinite(out)))
    assert bool(jnp.allclose(out, ref, rtol=1e-2, atol=1e-2))
    print("KERNEL_OK")
</pallas_src>

<mosaic_0001>
module attributes {stable_mosaic.version = 11 : i64} {
  func.func @_channel_gate_kernel(%arg0: i32, %arg1: memref<2x32x256xf32, #tpu.memory_space<vmem>>, %arg2: memref<32x4xf32, #tpu.memory_space<vmem>>, %arg3: memref<1x4xf32, #tpu.memory_space<vmem>>, %arg4: memref<4x32xf32, #tpu.memory_space<vmem>>, %arg5: memref<1x32xf32, #tpu.memory_space<vmem>>, %arg6: memref<2x32x256xf32, #tpu.memory_space<vmem>>) attributes {dimension_semantics = [#tpu.dimension_semantics<parallel>], iteration_bounds = array<i64: 1>, scalar_prefetch = 0 : i64, scratch_operands = 0 : i64, tpu.core_type = #tpu.core_type<tc>, window_params = [{transform_indices = @transform_0, window_bounds = array<i64: 2, 32, 256>}, {pipeline_mode = #tpu.pipeline_mode<synchronous>, transform_indices = @transform_1, window_bounds = array<i64: 32, 4>}, {pipeline_mode = #tpu.pipeline_mode<synchronous>, transform_indices = @transform_2, window_bounds = array<i64: 1, 4>}, {pipeline_mode = #tpu.pipeline_mode<synchronous>, transform_indices = @transform_3, window_bounds = array<i64: 4, 32>}, {pipeline_mode = #tpu.pipeline_mode<synchronous>, transform_indices = @transform_4, window_bounds = array<i64: 1, 32>}, {transform_indices = @transform_5, window_bounds = array<i64: 2, 32, 256>}]} {
    %c0 = arith.constant 0 : index
    %c0_0 = arith.constant 0 : index
    %c0_1 = arith.constant 0 : index
    %0 = vector.load %arg1[%c0, %c0_0, %c0_1] : memref<2x32x256xf32, #tpu.memory_space<vmem>>, vector<2x32x256xf32>
    %cst = arith.constant dense<0.000000e+00> : vector<2x32xf32>
    %1 = vector.multi_reduction <add>, %0, %cst [2] : vector<2x32x256xf32> to vector<2x32xf32>
    %cst_2 = arith.constant 3.906250e-03 : f32
    %2 = vector.broadcast %cst_2 : f32 to vector<2x32xf32>
    %3 = arith.mulf %1, %2 : vector<2x32xf32>
    %cst_3 = arith.constant dense<0xFF800000> : vector<2x32xf32>
    %4 = vector.multi_reduction <maximumf>, %0, %cst_3 [2] : vector<2x32x256xf32> to vector<2x32xf32>
    %c0_4 = arith.constant 0 : index
    %c0_5 = arith.constant 0 : index
    %5 = vector.load %arg2[%c0_4, %c0_5] : memref<32x4xf32, #tpu.memory_space<vmem>>, vector<32x4xf32>
    %c0_6 = arith.constant 0 : index
    %c0_7 = arith.constant 0 : index
    %6 = vector.load %arg3[%c0_6, %c0_7] : memref<1x4xf32, #tpu.memory_space<vmem>>, vector<1x4xf32>
    %c0_8 = arith.constant 0 : index
    %c0_9 = arith.constant 0 : index
    %7 = vector.load %arg4[%c0_8, %c0_9] : memref<4x32xf32, #tpu.memory_space<vmem>>, vector<4x32xf32>
    %c0_10 = arith.constant 0 : index
    %c0_11 = arith.constant 0 : index
    %8 = vector.load %arg5[%c0_10, %c0_11] : memref<1x32xf32, #tpu.memory_space<vmem>>, vector<1x32xf32>
    %9 = tpu.concatenate %3, %4 in 0 : vector<2x32xf32>, vector<2x32xf32> -> vector<4x32xf32>
    %cst_12 = arith.constant dense<0.000000e+00> : vector<4x4xf32>
    %10 = tpu.matmul %9, %5, %cst_12 {dimension_numbers = #tpu.dot_dimension_numbers<[1], [0], [0], [1], [0, 0, 1, 1], [], []>} : vector<4x32xf32>, vector<32x4xf32>, vector<4x4xf32> -> vector<4x4xf32>
    %11 = vector.broadcast %6 : vector<1x4xf32> to vector<4x4xf32>
    %12 = arith.addf %10, %11 : vector<4x4xf32>
    %cst_13 = arith.constant 0.000000e+00 : f32
    %13 = vector.broadcast %cst_13 : f32 to vector<4x4xf32>
    %14 = arith.maximumf %12, %13 : vector<4x4xf32>
    %cst_14 = arith.constant dense<0.000000e+00> : vector<4x32xf32>
    %15 = tpu.matmul %14, %7, %cst_14 {dimension_numbers = #tpu.dot_dimension_numbers<[1], [0], [0], [1], [0, 0, 1, 1], [], []>} : vector<4x4xf32>, vector<4x32xf32>, vector<4x32xf32> -> vector<4x32xf32>
    %16 = vector.broadcast %8 : vector<1x32xf32> to vector<4x32xf32>
    %17 = arith.addf %15, %16 : vector<4x32xf32>
    %18 = vector.extract_strided_slice %17 {offsets = [0, 0], sizes = [2, 32], strides = [1, 1]} : vector<4x32xf32> to vector<2x32xf32>
    %19 = vector.extract_strided_slice %17 {offsets = [2, 0], sizes = [2, 32], strides = [1, 1]} : vector<4x32xf32> to vector<2x32xf32>
    %20 = arith.addf %18, %19 : vector<2x32xf32>
    %cst_15 = arith.constant 0.000000e+00 : f32
    %21 = vector.broadcast %cst_15 : f32 to vector<2x32xf32>
    %22 = arith.subf %21, %20 : vector<2x32xf32>
    %23 = math.exp %22 : vector<2x32xf32>
    %cst_16 = arith.constant 1.000000e+00 : f32
    %24 = vector.broadcast %cst_16 : f32 to vector<2x32xf32>
    %25 = arith.addf %24, %23 : vector<2x32xf32>
    %26 = tpu.reciprocal %25 {approx = true} : vector<2x32xf32> -> vector<2x32xf32>
    %27 = vector.shape_cast %26 : vector<2x32xf32> to vector<2x32x1xf32>
    %28 = vector.broadcast %27 : vector<2x32x1xf32> to vector<2x32x256xf32>
    %29 = arith.mulf %0, %28 : vector<2x32x256xf32>
    %c0_17 = arith.constant 0 : index
    %c0_18 = arith.constant 0 : index
    %c0_19 = arith.constant 0 : index
    %30 = vector.load %arg6[%c0_17, %c0_18, %c0_19] : memref<2x32x256xf32, #tpu.memory_space<vmem>>, vector<2x32x256xf32>
    tpu.vector_store %arg6[%c0_17, %c0_18, %c0_19], %29 {strides = array<i32>} : memref<2x32x256xf32, #tpu.memory_space<vmem>>, vector<2x32x256xf32>,
    return
  }
  func.func @transform_0(%arg0: i32) -> (i32, i32, i32) {
    %c0_i32 = arith.constant 0 : i32
    %c0_i32_0 = arith.constant 0 : i32
    %c0_i32_1 = arith.constant 0 : i32
    return %arg0, %c0_i32, %c0_i32_0 : i32, i32, i32
  }
  func.func @transform_1(%arg0: i32) -> (i32, i32) {
    %c0_i32 = arith.constant 0 : i32
    %c0_i32_0 = arith.constant 0 : i32
    %c0_i32_1 = arith.constant 0 : i32
    return %c0_i32, %c0_i32_0 : i32, i32
  }
  func.func @transform_2(%arg0: i32) -> (i32, i32) {
    %c0_i32 = arith.constant 0 : i32
    %c0_i32_0 = arith.constant 0 : i32
    %c0_i32_1 = arith.constant 0 : i32
    return %c0_i32, %c0_i32_0 : i32, i32
  }
  func.func @transform_3(%arg0: i32) -> (i32, i32) {
    %c0_i32 = arith.constant 0 : i32
    %c0_i32_0 = arith.constant 0 : i32
    %c0_i32_1 = arith.constant 0 : i32
    return %c0_i32, %c0_i32_0 : i32, i32
  }
  func.func @transform_4(%arg0: i32) -> (i32, i32) {
    %c0_i32 = arith.constant 0 : i32
    %c0_i32_0 = arith.constant 0 : i32
    %c0_i32_1 = arith.constant 0 : i32
    return %c0_i32, %c0_i32_0 : i32, i32
  }
  func.func @transform_5(%arg0: i32) -> (i32, i32, i32) {
    %c0_i32 = arith.constant 0 : i32
    %c0_i32_0 = arith.constant 0 : i32
    %c0_i32_1 = arith.constant 0 : i32
    return %arg0, %c0_i32, %c0_i32_0 : i32, i32, i32
  }
}

</mosaic_0001>

<llo_original>
// kernel: tpu_custom_call.1
$region0: #{tpu_custom_call.1}
  #allocation0 [shape = 'u32[]', space=smem, size = 0x4, offset = 0x4, fixed_abs, tag = 'smem constant byte address 0x4 - core index']
  #allocation1 [shape = 'u32[144,128]{1,0:T(1,128)}', space=vmem, size = 0x12000, scoped, tag = 'internal scratch']
  %s0 = inlined_call_operand.hbm [shape: f32[2,32,256], index: 0, kind: input, shape index: {}]
  %s1 = inlined_call_operand.vmem [shape: f32[32,4], index: 1, kind: input, shape index: {}]
  %s2 = inlined_call_operand.vmem [shape: f32[1,4], index: 2, kind: input, shape index: {}]
  %s3 = inlined_call_operand.vmem [shape: f32[4,32], index: 3, kind: input, shape index: {}]
  %s4 = inlined_call_operand.vmem [shape: f32[1,32], index: 4, kind: input, shape index: {}]
  %s5 = inlined_call_operand.hbm [shape: f32[2,32,256], index: 5, kind: output, shape index: {}]
  %s6 = sld [smem:[#allocation0]]
  $region34: #{tpu_custom_call.1} parent=0
    _
  %s8 = ssub.s32 1, %s6
  %s9 = scalar_select 0, %s8, %s6
  $region1: #{tpu_custom_call.1} parent=0
    #allocation2 [shape = 'u8[65536]{0}', space=vmem, size = 0x10000, scoped, tag = 'input window, operand 0, single buffered']
    #allocation3 [shape = 's32[1]{0}', space=sflag, size = 0x4, scoped, tag = 'scoped memory for tpu_custom_call.1']
    #allocation4 [shape = 's32[1]{0}', space=sflag, size = 0x4, scoped, tag = 'scoped memory for tpu_custom_call.1']
    #allocation5 [shape = 'u8[65536]{0}', space=vmem, size = 0x10000, scoped, tag = 'output window, operand 0, single buffered']
    %10 = vsyncpa [#allocation3], 0
    %11 = vsyncpa [#allocation4], 0
    // Predicated region
    $region2: #{tpu_custom_call.1} parent=1 // pred_check
      _
    $region3: #{tpu_custom_call.1} parent=1 // pred_check_branch
      %13 = sbr.rel (0) target = $region5
    $region4: #{tpu_custom_call.1} parent=1 // pred_region
      %s15 = ssub.s32 2048, 2048
      %16 = vsyncadd [#allocation3], %s15
      %s17 = sshll.u32 [#allocation2], 4
      %s18 = int_to_ptr.vmem [resolvable:$true] %s17
      %23 = dma.hbm_to_vmem [thread:$0]  %s0, 2048, %s18, [#allocation3], 256, 256, 16
    $region5: #{tpu_custom_call.1} parent=1 // pred_fallthru
      _
    // Predicated region
    $region6: #{tpu_custom_call.1} parent=1 // pred_check
      _
    $region7: #{tpu_custom_call.1} parent=1 // pred_check_branch
      %25 = sbr.rel (0) target = $region9
    $region8: #{tpu_custom_call.1} parent=1 // pred_region
      _
    $region9: #{tpu_custom_call.1} parent=1 // pred_fallthru
      _
    // Predicated region
    $region10: #{tpu_custom_call.1} parent=1 // pred_check
      _
    $region11: #{tpu_custom_call.1} parent=1 // pred_check_branch
      %27 = sbr.rel (0) target = $region13
    $region12: #{tpu_custom_call.1} parent=1 // pred_region
      _
    $region13: #{tpu_custom_call.1} parent=1 // pred_fallthru
      _
    // Predicated region
    $region14: #{tpu_custom_call.1} parent=1 // pred_check
      _
    $region15: #{tpu_custom_call.1} parent=1 // pred_check_branch
      %29 = sbr.rel (0) target = $region17
    $region16: #{tpu_custom_call.1} parent=1 // pred_region
      _
    $region17: #{tpu_custom_call.1} parent=1 // pred_fallthru
      _
    // Predicated region
    $region18: #{tpu_custom_call.1} parent=1 // pred_check
      _
    $region19: #{tpu_custom_call.1} parent=1 // pred_check_branch
      %31 = sbr.rel (0) target = $region21
    $region20: #{tpu_custom_call.1} parent=1 // pred_region
      _
    $region21: #{tpu_custom_call.1} parent=1 // pred_fallthru
      _
    // Predicated region
    $region22: #{tpu_custom_call.1} parent=1 // pred_check
      _
    $region23: #{tpu_custom_call.1} parent=1 // pred_check_branch
      %33 = sbr.rel (0) target = $region25
    $region24: #{tpu_custom_call.1} parent=1 // pred_region
      %34 = dma.done [#allocation3], 2048
    $region25: #{tpu_custom_call.1} parent=1 // pred_fallthru
      _
    %v35 = vld [vmem:[#allocation2] sm:$0xff]
    %v36 = vld [vmem:[#allocation2 + $0x8] sm:$0xff]
    %v37 = vld [vmem:[#allocation2 + $0x10] sm:$0xff]
    %v38 = vld [vmem:[#allocation2 + $0x18] sm:$0xff]
    %v39 = vld [vmem:[#allocation2 + $0x20] sm:$0xff]
    %v40 = vld [vmem:[#allocation2 + $0x28] sm:$0xff]
    %v41 = vld [vmem:[#allocation2 + $0x30] sm:$0xff]
    %v42 = vld [vmem:[#allocation2 + $0x38] sm:$0xff]
    %v43 = vld [vmem:[#allocation2 + $0x40] sm:$0xff]
    %v44 = vld [vmem:[#allocation2 + $0x48] sm:$0xff]
    %v45 = vld [vmem:[#allocation2 + $0x50] sm:$0xff]
    %v46 = vld [vmem:[#allocation2 + $0x58] sm:$0xff]
    %v47 = vld [vmem:[#allocation2 + $0x60] sm:$0xff]
    %v48 = vld [vmem:[#allocation2 + $0x68] sm:$0xff]
    %v49 = vld [vmem:[#allocation2 + $0x70] sm:$0xff]
    %v50 = vld [vmem:[#allocation2 + $0x78] sm:$0xff]
    %v51 = vadd.f32 %v35, %v36
    %52 = vadd.xlane.f32.xlu0 %v51
    %v53 = vpop.xlane.xlu0 %52
    %v54 = vadd.f32 %v37, %v38
    %55 = vadd.xlane.f32.xlu0 %v54
    %v56 = vpop.xlane.xlu0 %55
    %v57 = vadd.f32 %v39, %v40
    %58 = vadd.xlane.f32.xlu0 %v57
    %v59 = vpop.xlane.xlu0 %58
    %v60 = vadd.f32 %v41, %v42
    %61 = vadd.xlane.f32.xlu0 %v60
    %v62 = vpop.xlane.xlu0 %61
    %v63 = vadd.f32 %v43, %v44
    %64 = vadd.xlane.f32.xlu0 %v63
    %v65 = vpop.xlane.xlu0 %64
    %v66 = vadd.f32 %v45, %v46
    %67 = vadd.xlane.f32.xlu0 %v66
    %v68 = vpop.xlane.xlu0 %67
    %v69 = vadd.f32 %v47, %v48
    %70 = vadd.xlane.f32.xlu0 %v69
    %v71 = vpop.xlane.xlu0 %70
    %v72 = vadd.f32 %v49, %v50
    %73 = vadd.xlane.f32.xlu0 %v72
    %v74 = vpop.xlane.xlu0 %73
    %v75 = vmul.f32 %v53, 0.00390625
    %v76 = vmul.f32 %v56, 0.00390625
    %v77 = vmul.f32 %v59, 0.00390625
    %v78 = vmul.f32 %v62, 0.00390625
    %v79 = vmul.f32 %v65, 0.00390625
    %v80 = vmul.f32 %v68, 0.00390625
    %v81 = vmul.f32 %v71, 0.00390625
    %v82 = vmul.f32 %v74, 0.00390625
    %v83 = vmax.f32 %v35, %v36
    %84 = vmax.xlane.f32.xlu0 %v83
    %v85 = vpop.xlane.xlu0 %84
    %v86 = vmax.f32 %v37, %v38
    %87 = vmax.xlane.f32.xlu0 %v86
    %v88 = vpop.xlane.xlu0 %87
    %v89 = vmax.f32 %v39, %v40
    %90 = vmax.xlane.f32.xlu0 %v89
    %v91 = vpop.xlane.xlu0 %90
    %v92 = vmax.f32 %v41, %v42
    %93 = vmax.xlane.f32.xlu0 %v92
    %v94 = vpop.xlane.xlu0 %93
    %v95 = vmax.f32 %v43, %v44
    %96 = vmax.xlane.f32.xlu0 %v95
    %v97 = vpop.xlane.xlu0 %96
    %v98 = vmax.f32 %v45, %v46
    %99 = vmax.xlane.f32.xlu0 %v98
    %v100 = vpop.xlane.xlu0 %99
    %v101 = vmax.f32 %v47, %v48
    %102 = vmax.xlane.f32.xlu0 %v101
    %v103 = vpop.xlane.xlu0 %102
    %v104 = vmax.f32 %v49, %v50
    %105 = vmax.xlane.f32.xlu0 %v104
    %v106 = vpop.xlane.xlu0 %105
    %v107 = vld [vmem:[%s1] sm:$0xff]
    %v108 = vld [vmem:[%s1 + $0x8] sm:$0xff]
    %v109 = vld [vmem:[%s1 + $0x10] sm:$0xff]
    %v110 = vld [vmem:[%s1 + $0x18] sm:$0xff]
    %v111 = vld [vmem:[%s2] sm:$0x1]
    %v112 = vld [vmem:[%s3] sm:$0xf]
    %v113 = vld [vmem:[%s4] sm:$0x1]
    %v122 = vlaneseq
    %v123 = vand.u32 %v122, 127
    %v124 = vlaneseq
    %v125 = vshrl.u32 %v124, 7
    %v126 = vsub.s32 %v123, %v125
    %v127 = vrot.slane %v75, %v126
    %v128 = vadd.s32 %v123, 4294967288
    %v129 = vlaneseq
    %v130 = vshrl.u32 %v129, 7
    %v131 = vsub.s32 %v128, %v130
    %v132 = vrot.slane %v76, %v131
    %vm133 = vcmask 130112
    %v134 = vsel %vm133, %v132, %v127
    %v135 = vadd.s32 %v123, 4294967280
    %v136 = vlaneseq
    %v137 = vshrl.u32 %v136, 7
    %v138 = vsub.s32 %v135, %v137
    %v139 = vrot.slane %v77, %v138
    %vm140 = vcmask 195712
    %v141 = vsel %vm140, %v139, %v134
    %v142 = vadd.s32 %v123, 4294967272
    %v143 = vlaneseq
    %v144 = vshrl.u32 %v143, 7
    %v145 = vsub.s32 %v142, %v144
    %v146 = vrot.slane %v78, %v145
    %vm147 = vcmask 261312
    %v148 = vsel %vm147, %v146, %v141
    %v149 = vlaneseq
    %v150 = vshrl.u32 %v149, 7
    %v151 = vsub.s32 %v123, %v150
    %v152 = vrot.slane %v79, %v151
    %v153 = vlaneseq
    %v154 = vshrl.u32 %v153, 7
    %v155 = vsub.s32 %v128, %v154
    %v156 = vrot.slane %v80, %v155
    %v157 = vsel %vm133, %v156, %v152
    %v158 = vlaneseq
    %v159 = vshrl.u32 %v158, 7
    %v160 = vsub.s32 %v135, %v159
    %v161 = vrot.slane %v81, %v160
    %v162 = vsel %vm140, %v161, %v157
    %v163 = vlaneseq
    %v164 = vshrl.u32 %v163, 7
    %v165 = vsub.s32 %v142, %v164
    %v166 = vrot.slane %v82, %v165
    %v167 = vsel %vm147, %v166, %v162
    %vm168 = vcmask 1041409
    %v169 = vsel %vm168, %v167, %v148
    %v179 = vlaneseq
    %v180 = vshrl.u32 %v179, 7
    %v181 = vsub.s32 %v123, %v180
    %v182 = vrot.slane %v85, %v181
    %v183 = vlaneseq
    %v184 = vshrl.u32 %v183, 7
    %v185 = vsub.s32 %v128, %v184
    %v186 = vrot.slane %v88, %v185
    %v187 = vsel %vm133, %v186, %v182
    %v188 = vlaneseq
    %v189 = vshrl.u32 %v188, 7
    %v190 = vsub.s32 %v135, %v189
    %v191 = vrot.slane %v91, %v190
    %v192 = vsel %vm140, %v191, %v187
    %v193 = vlaneseq
    %v194 = vshrl.u32 %v193, 7
    %v195 = vsub.s32 %v142, %v194
    %v196 = vrot.slane %v94, %v195
    %v197 = vsel %vm147, %v196, %v192
    %v198 = vlaneseq
    %v199 = vshrl.u32 %v198, 7
    %v200 = vsub.s32 %v123, %v199
    %v201 = vrot.slane %v97, %v200
    %v202 = vlaneseq
    %v203 = vshrl.u32 %v202, 7
    %v204 = vsub.s32 %v128, %v203
    %v205 = vrot.slane %v100, %v204
    %v206 = vsel %vm133, %v205, %v201
    %v207 = vlaneseq
    %v208 = vshrl.u32 %v207, 7
    %v209 = vsub.s32 %v135, %v208
    %v210 = vrot.slane %v103, %v209
    %v211 = vsel %vm140, %v210, %v206
    %v212 = vlaneseq
    %v213 = vshrl.u32 %v212, 7
    %v214 = vsub.s32 %v142, %v213
    %v215 = vrot.slane %v106, %v214
    %v216 = vsel %vm147, %v215, %v211
    %vm217 = vcmask 1043459
    %v218 = vsel %vm217, %v216, %v197
    %vm220 = vcmask 1041408
    %v221 = vsel %vm220, %v169, %v218
    %v223 = vlaneseq
    %v224 = vshrl.u32 %v223, 7
    %v225 = vsub.s32 0, %v224
    %v226 = vrot.slane %v111, %v225
    %vm228 = vcmask 261120
    %v230 = vsel %vm228, %v221, 0
    %232 = vmatprep.subr.mxu0 0.0
    %233 = vmatpush1.msra.mxu0 0.0
    %234 = vmatprep.subr.mxu0 0.0
    %235 = vmatpush1.msra.mxu0 0.0
    %236 = vmatprep.subr.mxu0 0.0
    %237 = vmatpush1.msra.mxu0 0.0
    %238 = vmatprep.subr.mxu0 0.0
    %239 = vmatpush1.msra.mxu0 0.0
    %240 = vmatprep.subr.mxu0 0.0
    %241 = vmatpush1.msra.mxu0 0.0
    %242 = vmatprep.subr.mxu0 0.0
    %243 = vmatpush1.msra.mxu0 0.0
    %244 = vmatprep.subr.mxu0 0.0
    %245 = vmatpush1.msra.mxu0 0.0
    %246 = vmatprep.subr.mxu0 0.0
    %247 = vmatpush1.msra.mxu0 0.0
    %248 = vmatprep.subr.mxu0 0.0
    %249 = vmatpush1.msra.mxu0 0.0
    %250 = vmatprep.subr.mxu0 0.0
    %251 = vmatpush1.msra.mxu0 0.0
    %252 = vmatprep.subr.mxu0 0.0
    %253 = vmatpush1.msra.mxu0 0.0
    %254 = vmatprep.subr.mxu0 0.0
    %255 = vmatpush1.msra.mxu0 0.0
    %256 = vmatprep.subr.mxu0 0.0
    %257 = vmatpush1.msra.mxu0 %v110
    %258 = vmatprep.subr.mxu0 0.0
    %259 = vmatpush1.msra.mxu0 %v109
    %260 = vmatprep.subr.mxu0 0.0
    %261 = vmatpush1.msra.mxu0 %v108
    %262 = vmatprep.subr.mxu0 0.0
    %263 = vmatpush1.msra.mxu0 %v107
    %264 = vmatprep.subr.mxu0 0.0
    %265 = vmatpush2.msra.mxu0 0.0
    %266 = vmatprep.subr.mxu0 0.0
    %267 = vmatpush2.msra.mxu0 0.0
    %268 = vmatprep.subr.mxu0 0.0
    %269 = vmatpush2.msra.mxu0 0.0
    %270 = vmatprep.subr.mxu0 0.0
    %271 = vmatpush2.msra.mxu0 0.0
    %272 = vmatprep.subr.mxu0 0.0
    %273 = vmatpush2.msra.mxu0 0.0
    %274 = vmatprep.subr.mxu0 0.0
    %275 = vmatpush2.msra.mxu0 0.0
    %276 = vmatprep.subr.mxu0 0.0
    %277 = vmatpush2.msra.mxu0 0.0
    %278 = vmatprep.subr.mxu0 0.0
    %279 = vmatpush2.msra.mxu0 0.0
    %280 = vmatprep.subr.mxu0 0.0
    %281 = vmatpush2.msra.mxu0 0.0
    %282 = vmatprep.subr.mxu0 0.0
    %283 = vmatpush2.msra.mxu0 0.0
    %284 = vmatprep.subr.mxu0 0.0
    %285 = vmatpush2.msra.mxu0 0.0
    %286 = vmatprep.subr.mxu0 0.0
    %287 = vmatpush2.msra.mxu0 0.0
    %288 = vmatprep.subr.mxu0 0.0
    %289 = vmatpush2.msra.mxu0 0.0
    %290 = vmatprep.subr.mxu0 0.0
    %291 = vmatpush2.msra.mxu0 0.0
    %292 = vmatprep.subr.mxu0 0.0
    %293 = vmatpush2.msra.mxu0 0.0
    %294 = vmatprep.subr.mxu0 0.0
    %295 = vmatpush2.msra.mxu0 0.0
    %296 = vmatprep.mubr.f32.mxu0 0.0
    %297 = vmatmul.mubr.f32.gmra.mxu0 %v230
    %v298 = vpop.f32.mrf.mxu0
    %v299 = vadd.f32 %v226, %v298
    %v300 = vpop.f32.mrf.mxu0
    %301 = vdwg.mxu0
    %v302 = vmax.f32 %v299, 0.0
    %v304 = vlaneseq
    %v305 = vshrl.u32 %v304, 7
    %v306 = vsub.s32 0, %v305
    %v307 = vrot.slane %v113, %v306
    %vm309 = vcmask 31744
    %v311 = vsel %vm309, %v302, 0
    %vm313 = vcmask 1043456
    %v315 = vsel %vm313, %v112, 0
    %317 = vmatprep.subr.mxu0 0.0
    %318 = vmatpush1.msra.mxu0 0.0
    %319 = vmatprep.subr.mxu0 0.0
    %320 = vmatpush1.msra.mxu0 0.0
    %321 = vmatprep.subr.mxu0 0.0
    %322 = vmatpush1.msra.mxu0 0.0
    %323 = vmatprep.subr.mxu0 0.0
    %324 = vmatpush1.msra.mxu0 0.0
    %325 = vmatprep.subr.mxu0 0.0
    %326 = vmatpush1.msra.mxu0 0.0
    %327 = vmatprep.subr.mxu0 0.0
    %328 = vmatpush1.msra.mxu0 0.0
    %329 = vmatprep.subr.mxu0 0.0
    %330 = vmatpush1.msra.mxu0 0.0
    %331 = vmatprep.subr.mxu0 0.0
    %332 = vmatpush1.msra.mxu0 0.0
    %333 = vmatprep.subr.mxu0 0.0
    %334 = vmatpush1.msra.mxu0 0.0
    %335 = vmatprep.subr.mxu0 0.0
    %336 = vmatpush1.msra.mxu0 0.0
    %337 = vmatprep.subr.mxu0 0.0
    %338 = vmatpush1.msra.mxu0 0.0
    %339 = vmatprep.subr.mxu0 0.0
    %340 = vmatpush1.msra.mxu0 0.0
    %341 = vmatprep.subr.mxu0 0.0
    %342 = vmatpush1.msra.mxu0 0.0
    %343 = vmatprep.subr.mxu0 0.0
    %344 = vmatpush1.msra.mxu0 0.0
    %345 = vmatprep.subr.mxu0 0.0
    %346 = vmatpush1.msra.mxu0 0.0
    %347 = vmatprep.subr.mxu0 0.0
    %348 = vmatpush1.msra.mxu0 %v315
    %349 = vmatprep.subr.mxu0 0.0
    %350 = vmatpush2.msra.mxu0 0.0
    %351 = vmatprep.subr.mxu0 0.0
    %352 = vmatpush2.msra.mxu0 0.0
    %353 = vmatprep.subr.mxu0 0.0
    %354 = vmatpush2.msra.mxu0 0.0
    %355 = vmatprep.subr.mxu0 0.0
    %356 = vmatpush2.msra.mxu0 0.0
    %357 = vmatprep.subr.mxu0 0.0
    %358 = vmatpush2.msra.mxu0 0.0
    %359 = vmatprep.subr.mxu0 0.0
    %360 = vmatpush2.msra.mxu0 0.0
    %361 = vmatprep.subr.mxu0 0.0
    %362 = vmatpush2.msra.mxu0 0.0
    %363 = vmatprep.subr.mxu0 0.0
    %364 = vmatpush2.msra.mxu0 0.0
    %365 = vmatprep.subr.mxu0 0.0
    %366 = vmatpush2.msra.mxu0 0.0
    %367 = vmatprep.subr.mxu0 0.0
    %368 = vmatpush2.msra.mxu0 0.0
    %369 = vmatprep.subr.mxu0 0.0
    %370 = vmatpush2.msra.mxu0 0.0
    %371 = vmatprep.subr.mxu0 0.0
    %372 = vmatpush2.msra.mxu0 0.0
    %373 = vmatprep.subr.mxu0 0.0
    %374 = vmatpush2.msra.mxu0 0.0
    %375 = vmatprep.subr.mxu0 0.0
    %376 = vmatpush2.msra.mxu0 0.0
    %377 = vmatprep.subr.mxu0 0.0
    %378 = vmatpush2.msra.mxu0 0.0
    %379 = vmatprep.subr.mxu0 0.0
    %380 = vmatpush2.msra.mxu0 0.0
    %381 = vmatprep.mubr.f32.mxu0 0.0
    %382 = vmatmul.mubr.f32.gmra.mxu0 %v311
    %v383 = vpop.f32.mrf.mxu0
    %v384 = vadd.f32 %v307, %v383
    %v385 = vpop.f32.mrf.mxu0
    %386 = vdwg.mxu0
    %v388 = vrot.slane %v384, 2
    %v390 = vadd.f32 %v384, %v388
    %v391 = vsub.f32 0.0, %v390
    %v392 = vmul.f32 %v391, 1.442695
    %v393 = vpow.pop %v392
    %v394 = vadd.f32 %v393, 1.0
    %v395 = vrcp.pop %v394
    %v396 = vlaneseq
    %v397 = vshrl.u32 %v396, 7
    %v398 = vsub.s32 0, %v397
    %v399 = vrot.slane %v395, %v398
    %401 = vbcast.lane.b32.xlu0 %v399, 256
    %v402 = vpop.permute.xlu0 %401
    %s404 = sor.u32 256, 8
    %405 = vbcast.lane.b32.xlu0 %v399, %s404
    %v406 = vpop.permute.xlu0 %405
    %s408 = sor.u32 256, 16
    %409 = vbcast.lane.b32.xlu0 %v399, %s408
    %v410 = vpop.permute.xlu0 %409
    %s412 = sor.u32 256, 24
    %413 = vbcast.lane.b32.xlu0 %v399, %s412
    %v414 = vpop.permute.xlu0 %413
    %v415 = vlaneseq
    %v416 = vshrl.u32 %v415, 7
    %v417 = vsub.s32 1, %v416
    %v418 = vrot.slane %v395, %v417
    %420 = vbcast.lane.b32.xlu0 %v418, 256
    %v421 = vpop.permute.xlu0 %420
    %s423 = sor.u32 256, 8
    %424 = vbcast.lane.b32.xlu0 %v418, %s423
    %v425 = vpop.permute.xlu0 %424
    %s427 = sor.u32 256, 16
    %428 = vbcast.lane.b32.xlu0 %v418, %s427
    %v429 = vpop.permute.xlu0 %428
    %s431 = sor.u32 256, 24
    %432 = vbcast.lane.b32.xlu0 %v418, %s431
    %v433 = vpop.permute.xlu0 %432
    %v434 = vmul.f32 %v35, %v402
    %v435 = vmul.f32 %v36, %v402
    %v436 = vmul.f32 %v37, %v406
    %v437 = vmul.f32 %v38, %v406
    %v438 = vmul.f32 %v39, %v410
    %v439 = vmul.f32 %v40, %v410
    %v440 = vmul.f32 %v41, %v414
    %v441 = vmul.f32 %v42, %v414
    %v442 = vmul.f32 %v43, %v421
    %v443 = vmul.f32 %v44, %v421
    %v444 = vmul.f32 %v45, %v425
    %v445 = vmul.f32 %v46, %v425
    %v446 = vmul.f32 %v47, %v429
    %v447 = vmul.f32 %v48, %v429
    %v448 = vmul.f32 %v49, %v433
    %v449 = vmul.f32 %v50, %v433
    %450 = vst [vmem:[#allocation5] sm:$0xff] %v434
    %451 = vst [vmem:[#allocation5 + $0x8] sm:$0xff] %v435
    %452 = vst [vmem:[#allocation5 + $0x10] sm:$0xff] %v436
    %453 = vst [vmem:[#allocation5 + $0x18] sm:$0xff] %v437
    %454 = vst [vmem:[#allocation5 + $0x20] sm:$0xff] %v438
    %455 = vst [vmem:[#allocation5 + $0x28] sm:$0xff] %v439
    %456 = vst [vmem:[#allocation5 + $0x30] sm:$0xff] %v440
    %457 = vst [vmem:[#allocation5 + $0x38] sm:$0xff] %v441
    %458 = vst [vmem:[#allocation5 + $0x40] sm:$0xff] %v442
    %459 = vst [vmem:[#allocation5 + $0x48] sm:$0xff] %v443
    %460 = vst [vmem:[#allocation5 + $0x50] sm:$0xff] %v444
    %461 = vst [vmem:[#allocation5 + $0x58] sm:$0xff] %v445
    %462 = vst [vmem:[#allocation5 + $0x60] sm:$0xff] %v446
    %463 = vst [vmem:[#allocation5 + $0x68] sm:$0xff] %v447
    %464 = vst [vmem:[#allocation5 + $0x70] sm:$0xff] %v448
    %465 = vst [vmem:[#allocation5 + $0x78] sm:$0xff] %v449
    // Predicated region
    $region26: #{tpu_custom_call.1} parent=1 // pred_check
      _
    $region27: #{tpu_custom_call.1} parent=1 // pred_check_branch
      %467 = sbr.rel (0) target = $region29
    $region28: #{tpu_custom_call.1} parent=1 // pred_region
      %s469 = ssub.s32 2048, 2048
      %470 = vsyncadd [#allocation4], %s469
      %s471 = sshll.u32 [#allocation5], 4
      %s472 = int_to_ptr.vmem [resolvable:$true] %s471
      %477 = dma.vmem_to_hbm [thread:$0]  %s472, 2048, %s5, [#allocation4], 256, 256, 16
    $region29: #{tpu_custom_call.1} parent=1 // pred_fallthru
      _
    // Predicated region
    $region30: #{tpu_custom_call.1} parent=1 // pred_check
      _
    $region31: #{tpu_custom_call.1} parent=1 // pred_check_branch
      %479 = sbr.rel (0) target = $region33
    $region32: #{tpu_custom_call.1} parent=1 // pred_region
      %480 = dma.done [#allocation4], 2048
    $region33: #{tpu_custom_call.1} parent=1 // pred_fallthru
      _
    %481 = vsyncpa [#allocation3], 1
    %482 = vsyncpa [#allocation4], 1

</llo_original>
